<compile_context>
chip_gen: v5e
topology: v5e:2x2
jax: 0.10.0
libtpu: 0.0.40
codegen_flags: <defaults>
</compile_context>

<pallas_src>
import functools

import jax
import jax.numpy as jnp
from jax import lax
from jax.experimental import pallas as pl
from jax.experimental.pallas import tpu as pltpu


def _round_up(x, m):
    return ((x + m - 1) // m) * m


def _gram_partial_kernel(d_ref, gram_ref, *, tp, P, steps_per_split, precision,
                         need_mask):
    """Accumulate one split's partial Gram: gram += D_tile^T @ D_tile."""
    c = pl.program_id(0)          # split index ("parallel"; 2 TCs on v7x)
    s = pl.program_id(1)          # P-reduction step within this split

    # Init the resident output block at the start of this split's reduction.
    @pl.when(s == 0)
    def _():
        gram_ref[...] = jnp.zeros_like(gram_ref)

    d_tile = d_ref[...]
    if need_mask:
        # Zero rows past the end of D: covers the ragged last P tile and any
        # clamped (fully out-of-range) steps of an uneven split.
        g = c * steps_per_split + s                       # global step index
        rows = g * tp + lax.broadcasted_iota(jnp.int32, (tp, 1), 0)
        d_tile = jnp.where(rows < P, d_tile, jnp.zeros_like(d_tile))

    update = lax.dot_general(
        d_tile,
        d_tile,
        dimension_numbers=(((0,), (0,)), ((), ())),   # contract the P axis
        preferred_element_type=jnp.float32,
        precision=precision,
    )
    gram_ref[...] += update[None, :, :]


def constraint2(D, d, n_clusters, *, precision=None, block_p=None):
    """Pallas implementation of Constraint2.forward(D, d, n_clusters)."""
    P, K = D.shape
    itemsize = jnp.dtype(D.dtype).itemsize

    # Precision knob: default HIGHEST for f32 (parity with the f32 reference).
    # On v5e, pass lax.Precision.DEFAULT/HIGH (or feed bf16 D) for ~3-6x MXU.
    if precision is None:
        precision = (lax.Precision.HIGHEST if D.dtype == jnp.float32
                     else lax.Precision.DEFAULT)

    # Physical VMEM-layout extents (budgeting only; no data padding is done).
    Kl = _round_up(K, 128)        # lane-padded columns
    K8 = _round_up(K, 8)          # sublane-padded rows of the Gram block

    # Generation-aware VMEM budget.
    try:
        vmem_cap = int(pltpu.get_tpu_info().vmem_capacity_bytes)
    except Exception:
        vmem_cap = 64 * 1024 * 1024          # conservative fallback (v7x size)
    budget = (3 * vmem_cap) // 4             # headroom for Mosaic scratch

    out_bytes = 2 * K8 * Kl * 4              # resident Gram block (+spare buf)
    avail = max(budget - out_bytes, 1 << 20)

    # P tile: as large as the budget allows, targeting ~8 MiB per input tile,
    # multiple of 512 when possible (MXU / bf16-sublane friendly).
    row_bytes = Kl * itemsize
    tp = int(min(avail // (2 * row_bytes), (8 << 20) // row_bytes))
    if tp >= 512:
        tp = (tp // 512) * 512
    tp = max(8, (tp // 8) * 8)
    tp = min(tp, _round_up(P, 8))            # don't over-tile tiny P
    if block_p is not None:                  # test/tuning override
        tp = max(8, int(block_p))

    total_steps = pl.cdiv(P, tp)
    # Leading "parallel" axis: v7x shards the two partial reductions across its
    # two TensorCores; on v5e/v6e it runs sequentially (negligible overhead).
    num_splits = 2 if total_steps >= 2 else 1
    steps_per_split = pl.cdiv(total_steps, num_splits)
    need_mask = (P % tp != 0) or (num_splits * steps_per_split != total_steps)

    def d_index_map(c, s):
        g = c * steps_per_split + s
        return (jnp.minimum(g, total_steps - 1), 0)   # clamp; mask zeroes it

    kernel = functools.partial(
        _gram_partial_kernel,
        tp=tp, P=P, steps_per_split=steps_per_split,
        precision=precision, need_mask=need_mask)

    in_bytes = 2 * tp * Kl * itemsize        # double-buffered input tile
    vmem_limit = in_bytes + out_bytes + (4 << 20)
    vmem_limit = int(min(max(vmem_limit, 16 << 20), vmem_cap - (12 << 20)))

    partial_grams = pl.pallas_call(
        kernel,
        out_shape=jax.ShapeDtypeStruct((num_splits, K, K), jnp.float32),
        grid=(num_splits, steps_per_split),
        in_specs=[pl.BlockSpec((tp, K), d_index_map)],
        out_specs=pl.BlockSpec((1, K, K), lambda c, s: (c, 0, 0)),
        compiler_params=pltpu.CompilerParams(
            dimension_semantics=("parallel", "arbitrary"),
            vmem_limit_bytes=vmem_limit,
        ),
        cost_estimate=pl.CostEstimate(
            flops=2 * P * K * K,
            transcendentals=0,
            bytes_accessed=P * K * itemsize + num_splits * K * K * 4,
        ),
    )(D)

    # Tiny O(K^2) follow-up: combine partial Grams, apply the block-diagonal
    # mask via static slice-subtract (matches torch S incl. K > n_clusters*d),
    # and take the Frobenius norm.
    G = jnp.sum(partial_grams, axis=0)
    total = jnp.sum(G * G)
    for i in range(n_clusters):
        lo = i * d
        if lo >= K:
            break
        hi = min((i + 1) * d, K)
        blk = G[lo:hi, lo:hi]
        total = total - jnp.sum(blk * blk)
    total = jnp.maximum(total, 0.0)          # guard sqrt against tiny negatives
    return 0.001 * jnp.sqrt(total)


def _reference(D, d, n_clusters):
    K = D.shape[1]
    S = jnp.ones((K, K), jnp.float32)
    for i in range(n_clusters):
        S = S.at[i * d:(i + 1) * d, i * d:(i + 1) * d].set(0.0)
    Df = D.astype(jnp.float32)
    G = jnp.matmul(Df.T, Df, precision=lax.Precision.HIGHEST)
    return 0.001 * jnp.linalg.norm(G * S)


if __name__ == "__main__":
    key = jax.random.PRNGKey(0)
    k1, k2 = jax.random.split(key)

    # Case 1: small aligned shape (ambient dim P=32, d=8, n_clusters=4 -> K=32).
    P, d, n_clusters = 32, 8, 4
    K = d * n_clusters
    D = jax.random.normal(k1, (P, K), dtype=jnp.float32)
    loss = constraint2(D, d, n_clusters)
    jax.block_until_ready(loss)
    ref = _reference(D, d, n_clusters)
    assert jnp.allclose(loss, ref, rtol=1e-4, atol=1e-5), (loss, ref)

    # Case 2: ragged P with a forced small tile -> exercises the in-kernel row
    # mask and the 2-way split / partial-Gram combine path.
    P2 = 40
    D2 = jax.random.normal(k2, (P2, K), dtype=jnp.float32)
    loss2 = constraint2(D2, d, n_clusters, block_p=16)
    jax.block_until_ready(loss2)
    ref2 = _reference(D2, d, n_clusters)
    assert jnp.allclose(loss2, ref2, rtol=1e-4, atol=1e-5), (loss2, ref2)

    print("KERNEL_OK")
</pallas_src>

<mosaic_0001>
module attributes {stable_mosaic.version = 11 : i64} {
  func.func @_gram_partial_kernel(%arg0: i32, %arg1: i32, %arg2: memref<32x32xf32, #tpu.memory_space<vmem>>, %arg3: memref<1x32x32xf32, #tpu.memory_space<vmem>>) attributes {dimension_semantics = [#tpu.dimension_semantics<parallel>, #tpu.dimension_semantics<arbitrary>], iteration_bounds = array<i64: 1, 1>, scalar_prefetch = 0 : i64, scratch_operands = 0 : i64, tpu.core_type = #tpu.core_type<tc>, window_params = [{transform_indices = @transform_0, window_bounds = array<i64: 32, 32>}, {transform_indices = @transform_1, window_bounds = array<i64: 1, 32, 32>}]} {
    %c0_i32 = arith.constant 0 : i32
    %0 = arith.cmpi eq, %arg1, %c0_i32 : i32
    %1 = arith.extui %0 : i1 to i32
    %c0_i32_0 = arith.constant 0 : i32
    %2 = arith.cmpi ne, %1, %c0_i32_0 : i32
    scf.if %2 {
      %cst_8 = arith.constant 0.000000e+00 : f32
      %9 = vector.broadcast %cst_8 : f32 to vector<1x32x32xf32>
      %c0_9 = arith.constant 0 : index
      %c0_10 = arith.constant 0 : index
      %c0_11 = arith.constant 0 : index
      %10 = vector.load %arg3[%c0_9, %c0_10, %c0_11] : memref<1x32x32xf32, #tpu.memory_space<vmem>>, vector<1x32x32xf32>
      tpu.vector_store %arg3[%c0_9, %c0_10, %c0_11], %9 {strides = array<i32>} : memref<1x32x32xf32, #tpu.memory_space<vmem>>, vector<1x32x32xf32>,
    } else {
    }
    %c0 = arith.constant 0 : index
    %c0_1 = arith.constant 0 : index
    %3 = vector.load %arg2[%c0, %c0_1] : memref<32x32xf32, #tpu.memory_space<vmem>>, vector<32x32xf32>
    %cst = arith.constant dense<0.000000e+00> : vector<32x32xf32>
    %4 = tpu.matmul %3, %3, %cst {dimension_numbers = #tpu.dot_dimension_numbers<[0], [0], [1], [1], [0, 1, 1, 1], [], []>, precision = #tpu.contract_precision<fp32>} : vector<32x32xf32>, vector<32x32xf32>, vector<32x32xf32> -> vector<32x32xf32>
    %c0_2 = arith.constant 0 : index
    %c0_3 = arith.constant 0 : index
    %c0_4 = arith.constant 0 : index
    %5 = vector.load %arg3[%c0_2, %c0_3, %c0_4] : memref<1x32x32xf32, #tpu.memory_space<vmem>>, vector<1x32x32xf32>
    %6 = vector.shape_cast %4 : vector<32x32xf32> to vector<1x32x32xf32>
    %7 = arith.addf %5, %6 : vector<1x32x32xf32>
    %c0_5 = arith.constant 0 : index
    %c0_6 = arith.constant 0 : index
    %c0_7 = arith.constant 0 : index
    %8 = vector.load %arg3[%c0_5, %c0_6, %c0_7] : memref<1x32x32xf32, #tpu.memory_space<vmem>>, vector<1x32x32xf32>
    tpu.vector_store %arg3[%c0_5, %c0_6, %c0_7], %7 {strides = array<i32>} : memref<1x32x32xf32, #tpu.memory_space<vmem>>, vector<1x32x32xf32>,
    return
  }
  func.func @transform_0(%arg0: i32, %arg1: i32) -> (i32, i32) {
    %c1_i32 = arith.constant 1 : i32
    %0 = arith.muli %arg0, %c1_i32 : i32
    %1 = arith.addi %0, %arg1 : i32
    %c0_i32 = arith.constant 0 : i32
    %2 = arith.minsi %1, %c0_i32 : i32
    %c0_i32_0 = arith.constant 0 : i32
    %c0_i32_1 = arith.constant 0 : i32
    return %2, %c0_i32_0 : i32, i32
  }
  func.func @transform_1(%arg0: i32, %arg1: i32) -> (i32, i32, i32) {
    %c0_i32 = arith.constant 0 : i32
    %c0_i32_0 = arith.constant 0 : i32
    %c0_i32_1 = arith.constant 0 : i32
    return %arg0, %c0_i32, %c0_i32_0 : i32, i32, i32
  }
}

</mosaic_0001>

<llo_original>
// kernel: tpu_custom_call.1
$region0: #{tpu_custom_call.1}
  #allocation0 [shape = 'u32[]', space=smem, size = 0x4, offset = 0x4, fixed_abs, tag = 'smem constant byte address 0x4 - core index']
  #allocation1 [shape = 'u32[72,128]{1,0:T(1,128)}', space=vmem, size = 0x9000, scoped, tag = 'internal scratch']
  %s0 = inlined_call_operand.hbm [shape: f32[32,32], index: 0, kind: input, shape index: {}]
  %s1 = inlined_call_operand.hbm [shape: f32[1,32,32], index: 1, kind: output, shape index: {}]
  %s2 = sld [smem:[#allocation0]]
  $region22: #{tpu_custom_call.1} parent=0
    _
  %s4 = ssub.s32 1, %s2
  %s5 = scalar_select 0, %s4, %s2
  $region1: #{tpu_custom_call.1} parent=0
    #allocation2 [shape = 'u8[16384]{0}', space=vmem, size = 0x4000, scoped, tag = 'input window, operand 0, single buffered']
    #allocation3 [shape = 's32[1]{0}', space=sflag, size = 0x4, scoped, tag = 'scoped memory for tpu_custom_call.1']
    #allocation4 [shape = 's32[1]{0}', space=sflag, size = 0x4, scoped, tag = 'scoped memory for tpu_custom_call.1']
    #allocation5 [shape = 'u8[16384]{0}', space=vmem, size = 0x4000, scoped, tag = 'output window, operand 0, single buffered']
    %6 = vsyncpa [#allocation3], 0
    %7 = vsyncpa [#allocation4], 0
    // Predicated region
    $region2: #{tpu_custom_call.1} parent=1 // pred_check
      _
    $region3: #{tpu_custom_call.1} parent=1 // pred_check_branch
      %9 = sbr.rel (0) target = $region5
    $region4: #{tpu_custom_call.1} parent=1 // pred_region
      %s10 = sadd.s32 0, 0
      %p11 = scmp.lt.s32.totalorder %s10, 0
      %s12 = scalar_select %p11, %s10, 0
      %s13 = smul.u32 4, %s12
      %15 = vsyncadd [#allocation3], 0
      %s16 = smul.addr %s13, 8
      %s17 = scalar_lea.hbm %s0, %s16
      %s18 = sshll.u32 %s17, 4
      %s19 = int_to_ptr.hbm [resolvable:$true] %s18
      %s20 = sshll.u32 [#allocation2], 4
      %s21 = int_to_ptr.vmem [resolvable:$true] %s20
      %26 = dma.hbm_to_vmem [thread:$0]  %s19, 512, %s21, [#allocation3], 128, 128, 8
    $region5: #{tpu_custom_call.1} parent=1 // pred_fallthru
      _
    // Predicated region
    $region6: #{tpu_custom_call.1} parent=1 // pred_check
      _
    $region7: #{tpu_custom_call.1} parent=1 // pred_check_branch
      %28 = sbr.rel (0) target = $region9
    $region8: #{tpu_custom_call.1} parent=1 // pred_region
      %30 = dma.done [#allocation3], 512
    $region9: #{tpu_custom_call.1} parent=1 // pred_fallthru
      _
    %s31 = sadd.s32 0, 0
    %p32 = scmp.lt.s32.totalorder %s31, 0
    %s33 = scalar_select %p32, %s31, 0
    %s34 = smul.u32 4, %s33
    %p35 = scmp.eq.s32.totalorder 0, 0
    // Predicated region
    $region10: #{tpu_custom_call.1} parent=1 // pred_check
      %p36 = pneg %p35
    $region11: #{tpu_custom_call.1} parent=1 // pred_check_branch
      %38 = sbr.rel (%p36) target = $region13
    $region12: #{tpu_custom_call.1} parent=1 // pred_region
      %vm39 = vcmask 261120
      %40 = vst.msk [vmem:[#allocation5] sm:$0xff] %vm39, 0.0
      %41 = vst.msk [vmem:[#allocation5 + $0x8] sm:$0xff] %vm39, 0.0
      %42 = vst.msk [vmem:[#allocation5 + $0x10] sm:$0xff] %vm39, 0.0
      %43 = vst.msk [vmem:[#allocation5 + $0x18] sm:$0xff] %vm39, 0.0
    $region13: #{tpu_custom_call.1} parent=1 // pred_fallthru
      _
    %v44 = vld [vmem:[#allocation2] sm:$0xff]
    %v45 = vld [vmem:[#allocation2 + $0x8] sm:$0xff]
    %v46 = vld [vmem:[#allocation2 + $0x10] sm:$0xff]
    %v47 = vld [vmem:[#allocation2 + $0x18] sm:$0xff]
    %48 = vxpose.xlu0.b32.start [1/16] %v44, 128
    %49 = vxpose.xlu0.b32.cont [2/16] %v45, 128
    %50 = vxpose.xlu0.b32.cont [3/16] %v46, 128
    %51 = vxpose.xlu0.b32.cont [4/16] %v47, 128
    %52 = vxpose.xlu0.b32.cont [5/16] 0.0, 128
    %53 = vxpose.xlu0.b32.cont [6/16] 0.0, 128
    %54 = vxpose.xlu0.b32.cont [7/16] 0.0, 128
    %55 = vxpose.xlu0.b32.cont [8/16] 0.0, 128
    %56 = vxpose.xlu0.b32.cont [9/16] 0.0, 128
    %57 = vxpose.xlu0.b32.cont [10/16] 0.0, 128
    %58 = vxpose.xlu0.b32.cont [11/16] 0.0, 128
    %59 = vxpose.xlu0.b32.cont [12/16] 0.0, 128
    %60 = vxpose.xlu0.b32.cont [13/16] 0.0, 128
    %61 = vxpose.xlu0.b32.cont [14/16] 0.0, 128
    %62 = vxpose.xlu0.b32.cont [15/16] 0.0, 128
    %63 = vxpose.xlu0.b32.end [16/16] 0.0, 128
    %v64 = vpop.trf.xlu0
    %v65 = vpop.trf.xlu0
    %v66 = vpop.trf.xlu0
    %v67 = vpop.trf.xlu0
    %v68 = vpop.trf.xlu0
    %v69 = vpop.trf.xlu0
    %v70 = vpop.trf.xlu0
    %v71 = vpop.trf.xlu0
    %v72 = vpop.trf.xlu0
    %v73 = vpop.trf.xlu0
    %v74 = vpop.trf.xlu0
    %v75 = vpop.trf.xlu0
    %v76 = vpop.trf.xlu0
    %v77 = vpop.trf.xlu0
    %v78 = vpop.trf.xlu0
    %v79 = vpop.trf.xlu0
    %vm80 = vcmask 261120
    %v82 = vsel %vm80, %v64, 0
    %v85 = vsel %vm80, %v65, 0
    %v88 = vsel %vm80, %v66, 0
    %v91 = vsel %vm80, %v67, 0
    %93 = vmatpush.msra.mxu0 0.0
    %94 = vmatpush.msra.mxu0 0.0
    %95 = vmatpush.msra.mxu0 0.0
    %96 = vmatpush.msra.mxu0 0.0
    %97 = vmatpush.msra.mxu0 0.0
    %98 = vmatpush.msra.mxu0 0.0
    %99 = vmatpush.msra.mxu0 0.0
    %100 = vmatpush.msra.mxu0 0.0
    %101 = vmatpush.msra.mxu0 0.0
    %102 = vmatpush.msra.mxu0 0.0
    %103 = vmatpush.msra.mxu0 0.0
    %104 = vmatpush.msra.mxu0 0.0
    %v105 = vand.u32 %v47, 4294901760
    %106 = vmatpush.msra.mxu0 %v105
    %v107 = vand.u32 %v46, 4294901760
    %108 = vmatpush.msra.mxu0 %v107
    %v109 = vand.u32 %v45, 4294901760
    %110 = vmatpush.msra.mxu0 %v109
    %v111 = vand.u32 %v44, 4294901760
    %112 = vmatpush.msra.mxu0 %v111
    %v113 = vand.u32 %v82, 4294901760
    %v114 = vsub.f32 %v82, %v113
    %v115 = vand.u32 %v114, 4294901760
    %v116 = vsub.f32 %v114, %v115
    %v117 = vand.u32 %v116, 4294901760
    %118 = vmatmul.f32.gmra.mxu0 %v117
    %v119 = vpop.f32.mrf.mxu0
    %v120 = vadd.f32 0.0, %v119
    %v121 = vand.u32 %v85, 4294901760
    %v122 = vsub.f32 %v85, %v121
    %v123 = vand.u32 %v122, 4294901760
    %v124 = vsub.f32 %v122, %v123
    %v125 = vand.u32 %v124, 4294901760
    %126 = vmatmul.f32.gmra.mxu0 %v125
    %v127 = vpop.f32.mrf.mxu0
    %v128 = vadd.f32 0.0, %v127
    %v129 = vand.u32 %v88, 4294901760
    %v130 = vsub.f32 %v88, %v129
    %v131 = vand.u32 %v130, 4294901760
    %v132 = vsub.f32 %v130, %v131
    %v133 = vand.u32 %v132, 4294901760
    %134 = vmatmul.f32.gmra.mxu0 %v133
    %v135 = vpop.f32.mrf.mxu0
    %v136 = vadd.f32 0.0, %v135
    %v137 = vand.u32 %v91, 4294901760
    %v138 = vsub.f32 %v91, %v137
    %v139 = vand.u32 %v138, 4294901760
    %v140 = vsub.f32 %v138, %v139
    %v141 = vand.u32 %v140, 4294901760
    %142 = vmatmul.f32.gmra.mxu0 %v141
    %v143 = vpop.f32.mrf.mxu0
    %v144 = vadd.f32 0.0, %v143
    %145 = vdwg.mxu0
    %146 = vmatpush.msra.mxu0 0.0
    %147 = vmatpush.msra.mxu0 0.0
    %148 = vmatpush.msra.mxu0 0.0
    %149 = vmatpush.msra.mxu0 0.0
    %150 = vmatpush.msra.mxu0 0.0
    %151 = vmatpush.msra.mxu0 0.0
    %152 = vmatpush.msra.mxu0 0.0
    %153 = vmatpush.msra.mxu0 0.0
    %154 = vmatpush.msra.mxu0 0.0
    %155 = vmatpush.msra.mxu0 0.0
    %156 = vmatpush.msra.mxu0 0.0
    %157 = vmatpush.msra.mxu0 0.0
    %v158 = vand.u32 %v47, 4294901760
    %v159 = vsub.f32 %v47, %v158
    %v160 = vand.u32 %v159, 4294901760
    %v161 = vsub.f32 %v159, %v160
    %v162 = vand.u32 %v161, 4294901760
    %163 = vmatpush.msra.mxu0 %v162
    %v164 = vand.u32 %v46, 4294901760
    %v165 = vsub.f32 %v46, %v164
    %v166 = vand.u32 %v165, 4294901760
    %v167 = vsub.f32 %v165, %v166
    %v168 = vand.u32 %v167, 4294901760
    %169 = vmatpush.msra.mxu0 %v168
    %v170 = vand.u32 %v45, 4294901760
    %v171 = vsub.f32 %v45, %v170
    %v172 = vand.u32 %v171, 4294901760
    %v173 = vsub.f32 %v171, %v172
    %v174 = vand.u32 %v173, 4294901760
    %175 = vmatpush.msra.mxu0 %v174
    %v176 = vand.u32 %v44, 4294901760
    %v177 = vsub.f32 %v44, %v176
    %v178 = vand.u32 %v177, 4294901760
    %v179 = vsub.f32 %v177, %v178
    %v180 = vand.u32 %v179, 4294901760
    %181 = vmatpush.msra.mxu0 %v180
    %v182 = vand.u32 %v82, 4294901760
    %183 = vmatmul.f32.gmra.mxu0 %v182
    %v184 = vpop.f32.mrf.mxu0
    %v185 = vadd.f32 %v120, %v184
    %v186 = vand.u32 %v85, 4294901760
    %187 = vmatmul.f32.gmra.mxu0 %v186
    %v188 = vpop.f32.mrf.mxu0
    %v189 = vadd.f32 %v128, %v188
    %v190 = vand.u32 %v88, 4294901760
    %191 = vmatmul.f32.gmra.mxu0 %v190
    %v192 = vpop.f32.mrf.mxu0
    %v193 = vadd.f32 %v136, %v192
    %v194 = vand.u32 %v91, 4294901760
    %195 = vmatmul.f32.gmra.mxu0 %v194
    %v196 = vpop.f32.mrf.mxu0
    %v197 = vadd.f32 %v144, %v196
    %198 = vdwg.mxu0
    %199 = vmatpush.msra.mxu0 0.0
    %200 = vmatpush.msra.mxu0 0.0
    %201 = vmatpush.msra.mxu0 0.0
    %202 = vmatpush.msra.mxu0 0.0
    %203 = vmatpush.msra.mxu0 0.0
    %204 = vmatpush.msra.mxu0 0.0
    %205 = vmatpush.msra.mxu0 0.0
    %206 = vmatpush.msra.mxu0 0.0
    %207 = vmatpush.msra.mxu0 0.0
    %208 = vmatpush.msra.mxu0 0.0
    %209 = vmatpush.msra.mxu0 0.0
    %210 = vmatpush.msra.mxu0 0.0
    %v211 = vand.u32 %v47, 4294901760
    %v212 = vsub.f32 %v47, %v211
    %213 = vmatpush.msra.mxu0 %v212
    %v214 = vand.u32 %v46, 4294901760
    %v215 = vsub.f32 %v46, %v214
    %216 = vmatpush.msra.mxu0 %v215
    %v217 = vand.u32 %v45, 4294901760
    %v218 = vsub.f32 %v45, %v217
    %219 = vmatpush.msra.mxu0 %v218
    %v220 = vand.u32 %v44, 4294901760
    %v221 = vsub.f32 %v44, %v220
    %222 = vmatpush.msra.mxu0 %v221
    %v223 = vand.u32 %v82, 4294901760
    %v224 = vsub.f32 %v82, %v223
    %225 = vmatmul.f32.gmra.mxu0 %v224
    %v226 = vpop.f32.mrf.mxu0
    %v227 = vadd.f32 %v185, %v226
    %v228 = vand.u32 %v85, 4294901760
    %v229 = vsub.f32 %v85, %v228
    %230 = vmatmul.f32.gmra.mxu0 %v229
    %v231 = vpop.f32.mrf.mxu0
    %v232 = vadd.f32 %v189, %v231
    %v233 = vand.u32 %v88, 4294901760
    %v234 = vsub.f32 %v88, %v233
    %235 = vmatmul.f32.gmra.mxu0 %v234
    %v236 = vpop.f32.mrf.mxu0
    %v237 = vadd.f32 %v193, %v236
    %v238 = vand.u32 %v91, 4294901760
    %v239 = vsub.f32 %v91, %v238
    %240 = vmatmul.f32.gmra.mxu0 %v239
    %v241 = vpop.f32.mrf.mxu0
    %v242 = vadd.f32 %v197, %v241
    %243 = vdwg.mxu0
    %244 = vmatpush.msra.mxu0 0.0
    %245 = vmatpush.msra.mxu0 0.0
    %246 = vmatpush.msra.mxu0 0.0
    %247 = vmatpush.msra.mxu0 0.0
    %248 = vmatpush.msra.mxu0 0.0
    %249 = vmatpush.msra.mxu0 0.0
    %250 = vmatpush.msra.mxu0 0.0
    %251 = vmatpush.msra.mxu0 0.0
    %252 = vmatpush.msra.mxu0 0.0
    %253 = vmatpush.msra.mxu0 0.0
    %254 = vmatpush.msra.mxu0 0.0
    %255 = vmatpush.msra.mxu0 0.0
    %v256 = vand.u32 %v47, 4294901760
    %257 = vmatpush.msra.mxu0 %v256
    %v258 = vand.u32 %v46, 4294901760
    %259 = vmatpush.msra.mxu0 %v258
    %v260 = vand.u32 %v45, 4294901760
    %261 = vmatpush.msra.mxu0 %v260
    %v262 = vand.u32 %v44, 4294901760
    %263 = vmatpush.msra.mxu0 %v262
    %v264 = vand.u32 %v82, 4294901760
    %v265 = vsub.f32 %v82, %v264
    %v266 = vand.u32 %v265, 4294901760
    %267 = vmatmul.f32.gmra.mxu0 %v266
    %v268 = vpop.f32.mrf.mxu0
    %v269 = vadd.f32 %v227, %v268
    %v270 = vand.u32 %v85, 4294901760
    %v271 = vsub.f32 %v85, %v270
    %v272 = vand.u32 %v271, 4294901760
    %273 = vmatmul.f32.gmra.mxu0 %v272
    %v274 = vpop.f32.mrf.mxu0
    %v275 = vadd.f32 %v232, %v274
    %v276 = vand.u32 %v88, 4294901760
    %v277 = vsub.f32 %v88, %v276
    %v278 = vand.u32 %v277, 4294901760
    %279 = vmatmul.f32.gmra.mxu0 %v278
    %v280 = vpop.f32.mrf.mxu0
    %v281 = vadd.f32 %v237, %v280
    %v282 = vand.u32 %v91, 4294901760
    %v283 = vsub.f32 %v91, %v282
    %v284 = vand.u32 %v283, 4294901760
    %285 = vmatmul.f32.gmra.mxu0 %v284
    %v286 = vpop.f32.mrf.mxu0
    %v287 = vadd.f32 %v242, %v286
    %288 = vdwg.mxu0
    %289 = vmatpush.msra.mxu0 0.0
    %290 = vmatpush.msra.mxu0 0.0
    %291 = vmatpush.msra.mxu0 0.0
    %292 = vmatpush.msra.mxu0 0.0
    %293 = vmatpush.msra.mxu0 0.0
    %294 = vmatpush.msra.mxu0 0.0
    %295 = vmatpush.msra.mxu0 0.0
    %296 = vmatpush.msra.mxu0 0.0
    %297 = vmatpush.msra.mxu0 0.0
    %298 = vmatpush.msra.mxu0 0.0
    %299 = vmatpush.msra.mxu0 0.0
    %300 = vmatpush.msra.mxu0 0.0
    %v301 = vand.u32 %v47, 4294901760
    %v302 = vsub.f32 %v47, %v301
    %v303 = vand.u32 %v302, 4294901760
    %304 = vmatpush.msra.mxu0 %v303
    %v305 = vand.u32 %v46, 4294901760
    %v306 = vsub.f32 %v46, %v305
    %v307 = vand.u32 %v306, 4294901760
    %308 = vmatpush.msra.mxu0 %v307
    %v309 = vand.u32 %v45, 4294901760
    %v310 = vsub.f32 %v45, %v309
    %v311 = vand.u32 %v310, 4294901760
    %312 = vmatpush.msra.mxu0 %v311
    %v313 = vand.u32 %v44, 4294901760
    %v314 = vsub.f32 %v44, %v313
    %v315 = vand.u32 %v314, 4294901760
    %316 = vmatpush.msra.mxu0 %v315
    %v317 = vand.u32 %v82, 4294901760
    %318 = vmatmul.f32.gmra.mxu0 %v317
    %v319 = vpop.f32.mrf.mxu0
    %v320 = vadd.f32 %v269, %v319
    %v321 = vand.u32 %v85, 4294901760
    %322 = vmatmul.f32.gmra.mxu0 %v321
    %v323 = vpop.f32.mrf.mxu0
    %v324 = vadd.f32 %v275, %v323
    %v325 = vand.u32 %v88, 4294901760
    %326 = vmatmul.f32.gmra.mxu0 %v325
    %v327 = vpop.f32.mrf.mxu0
    %v328 = vadd.f32 %v281, %v327
    %v329 = vand.u32 %v91, 4294901760
    %330 = vmatmul.f32.gmra.mxu0 %v329
    %v331 = vpop.f32.mrf.mxu0
    %v332 = vadd.f32 %v287, %v331
    %333 = vdwg.mxu0
    %334 = vmatpush.msra.mxu0 0.0
    %335 = vmatpush.msra.mxu0 0.0
    %336 = vmatpush.msra.mxu0 0.0
    %337 = vmatpush.msra.mxu0 0.0
    %338 = vmatpush.msra.mxu0 0.0
    %339 = vmatpush.msra.mxu0 0.0
    %340 = vmatpush.msra.mxu0 0.0
    %341 = vmatpush.msra.mxu0 0.0
    %342 = vmatpush.msra.mxu0 0.0
    %343 = vmatpush.msra.mxu0 0.0
    %344 = vmatpush.msra.mxu0 0.0
    %345 = vmatpush.msra.mxu0 0.0
    %v346 = vand.u32 %v47, 4294901760
    %347 = vmatpush.msra.mxu0 %v346
    %v348 = vand.u32 %v46, 4294901760
    %349 = vmatpush.msra.mxu0 %v348
    %v350 = vand.u32 %v45, 4294901760
    %351 = vmatpush.msra.mxu0 %v350
    %v352 = vand.u32 %v44, 4294901760
    %353 = vmatpush.msra.mxu0 %v352
    %v354 = vand.u32 %v82, 4294901760
    %355 = vmatmul.f32.gmra.mxu0 %v354
    %v356 = vpop.f32.mrf.mxu0
    %v357 = vadd.f32 %v320, %v356
    %v358 = vand.u32 %v85, 4294901760
    %359 = vmatmul.f32.gmra.mxu0 %v358
    %v360 = vpop.f32.mrf.mxu0
    %v361 = vadd.f32 %v324, %v360
    %v362 = vand.u32 %v88, 4294901760
    %363 = vmatmul.f32.gmra.mxu0 %v362
    %v364 = vpop.f32.mrf.mxu0
    %v365 = vadd.f32 %v328, %v364
    %v366 = vand.u32 %v91, 4294901760
    %367 = vmatmul.f32.gmra.mxu0 %v366
    %v368 = vpop.f32.mrf.mxu0
    %v369 = vadd.f32 %v332, %v368
    %370 = vdwg.mxu0
    %v371 = vld [vmem:[#allocation5] sm:$0xff]
    %v372 = vld [vmem:[#allocation5 + $0x8] sm:$0xff]
    %v373 = vld [vmem:[#allocation5 + $0x10] sm:$0xff]
    %v374 = vld [vmem:[#allocation5 + $0x18] sm:$0xff]
    %v375 = vadd.f32 %v371, %v357
    %v376 = vadd.f32 %v372, %v361
    %v377 = vadd.f32 %v373, %v365
    %v378 = vadd.f32 %v374, %v369
    %379 = vst.msk [vmem:[#allocation5] sm:$0xff] %vm80, %v375
    %380 = vst.msk [vmem:[#allocation5 + $0x8] sm:$0xff] %vm80, %v376
    %381 = vst.msk [vmem:[#allocation5 + $0x10] sm:$0xff] %vm80, %v377
    %382 = vst.msk [vmem:[#allocation5 + $0x18] sm:$0xff] %vm80, %v378
    // Predicated region
    $region14: #{tpu_custom_call.1} parent=1 // pred_check
      _
    $region15: #{tpu_custom_call.1} parent=1 // pred_check_branch
      %384 = sbr.rel (0) target = $region17
    $region16: #{tpu_custom_call.1} parent=1 // pred_region
      %386 = vsyncadd [#allocation4], 0
      %s387 = sshll.u32 [#allocation5], 4
      %s388 = int_to_ptr.vmem [resolvable:$true] %s387
      %s389 = sshll.u32 %s1, 4
      %s390 = int_to_ptr.hbm [resolvable:$true] %s389
      %395 = dma.vmem_to_hbm [thread:$0]  %s388, 512, %s390, [#allocation4], 128, 128, 8
    $region17: #{tpu_custom_call.1} parent=1 // pred_fallthru
      _
    // Predicated region
    $region18: #{tpu_custom_call.1} parent=1 // pred_check
      _
    $region19: #{tpu_custom_call.1} parent=1 // pred_check_branch
      %397 = sbr.rel (0) target = $region21
    $region20: #{tpu_custom_call.1} parent=1 // pred_region
      %399 = dma.done [#allocation4], 512
    $region21: #{tpu_custom_call.1} parent=1 // pred_fallthru
      _
    %400 = vsyncpa [#allocation3], 1
    %401 = vsyncpa [#allocation4], 1

</llo_original>
